<compile_context>
chip_gen: v5e
topology: v5e:2x2
jax: 0.10.0
libtpu: 0.0.40
codegen_flags: <defaults>
</compile_context>

<pallas_src>
import functools

import jax
import jax.numpy as jnp
from jax.experimental import pallas as pl
from jax.experimental.pallas import tpu as pltpu


def _round_up(x, m):
    return (x + m - 1) // m * m


def _cdiv(a, b):
    return (a + b - 1) // b


def _silu(x):
    # x * sigmoid(x); sigmoid(x) = 0.5 * (tanh(x/2) + 1): a single EUP tanh
    # plus VPU mul/add (vs. exp + reciprocal = two EUP ops).
    return x * (0.5 * jnp.tanh(0.5 * x) + 0.5)


def legality_kernel(feat_ref, w1_ref, b1_ref, w2_ref, b2_ref, w3_ref, b3_ref,
                    out_ref, *, apply_sigmoid=False):
    # Cast the feature tile to bf16 in-kernel (hidden under the MXU).
    x = feat_ref[...].astype(jnp.bfloat16)
    # Layer 1: bf16 matmul, f32 accumulation, f32 bias + SiLU.
    h = jnp.dot(x, w1_ref[...], preferred_element_type=jnp.float32)
    h = _silu(h + b1_ref[...])
    # Layer 2.
    h = jnp.dot(h.astype(jnp.bfloat16), w2_ref[...],
                preferred_element_type=jnp.float32)
    h = _silu(h + b2_ref[...])
    # Output layer: logits (sigmoid optionally fused; module returns logits).
    out = jnp.dot(h.astype(jnp.bfloat16), w3_ref[...],
                  preferred_element_type=jnp.float32) + b3_ref[...]
    if apply_sigmoid:
        out = 0.5 * jnp.tanh(0.5 * out) + 0.5
    out_ref[...] = out.astype(out_ref.dtype)


def prepare_params(params):
    """One-time weight preparation (hoisted out of the per-call path).

    - Pads hidden and output widths to 128-lane multiples (zero padding is
      exact: zero bias -> SiLU(0) = 0 -> zero rows of the next weight
      contribute nothing; extra output columns are sliced off).
    - Casts weights to bf16 (native MXU dtype, halves weight DMA bytes);
      biases stay f32 with shape (1, out) for the f32 bias-add/SiLU path.
    """
    w1, b1 = params["w1"], jnp.reshape(params["b1"], (1, -1))
    w2, b2 = params["w2"], jnp.reshape(params["b2"], (1, -1))
    w3, b3 = params["w3"], jnp.reshape(params["b3"], (1, -1))
    n_actions = w3.shape[1]

    def pad_cols(w, b, target):
        pad = target - w.shape[1]
        if pad:
            w = jnp.pad(w, ((0, 0), (0, pad)))
            b = jnp.pad(b, ((0, 0), (0, pad)))
        return w, b

    def pad_rows(w, target):
        pad = target - w.shape[0]
        if pad:
            w = jnp.pad(w, ((0, pad), (0, 0)))
        return w

    h1p = _round_up(w1.shape[1], 128)
    h2p = _round_up(w2.shape[1], 128)
    nap = _round_up(n_actions, 128)

    w1, b1 = pad_cols(w1, b1, h1p)
    w2 = pad_rows(w2, h1p)
    w2, b2 = pad_cols(w2, b2, h2p)
    w3 = pad_rows(w3, h2p)
    w3, b3 = pad_cols(w3, b3, nap)

    return {
        "w1": w1.astype(jnp.bfloat16), "b1": b1.astype(jnp.float32),
        "w2": w2.astype(jnp.bfloat16), "b2": b2.astype(jnp.float32),
        "w3": w3.astype(jnp.bfloat16), "b3": b3.astype(jnp.float32),
        "n_actions": n_actions,
    }


def _pick_tile_b(B, cap=1024):
    if B <= cap:
        return _round_up(B, 8)
    # Large B: big tiles to amortize per-grid-step overhead, with an EVEN
    # number of grid steps so the "parallel" batch axis shards across both
    # v7x TensorCores.
    steps = _cdiv(B, cap)
    if steps % 2:
        steps += 1
    return _round_up(_cdiv(B, steps), 8)


def legality_net(feat, prepared, *, tile_b=None, out_dtype=None,
                 apply_sigmoid=False):
    """feat: [B, in_dim] float32; prepared: output of prepare_params()."""
    B, in_dim = feat.shape
    w1, b1 = prepared["w1"], prepared["b1"]
    w2, b2 = prepared["w2"], prepared["b2"]
    w3, b3 = prepared["w3"], prepared["b3"]
    n_actions = prepared["n_actions"]
    assert w1.shape[0] == in_dim, (w1.shape, in_dim)
    h1p, h2p, nap = w1.shape[1], w2.shape[1], w3.shape[1]
    if out_dtype is None:
        out_dtype = feat.dtype

    if tile_b is None:
        tile_b = _pick_tile_b(B)
    B_p = _round_up(B, tile_b)
    if B_p != B:
        feat = jnp.pad(feat, ((0, B_p - B), (0, 0)))

    grid = (B_p // tile_b,)

    # Weights/biases are resident across the grid (constant index maps) and
    # never re-fetched -> single-buffered to avoid wasting VMEM.
    def _wspec(shape):
        return pl.BlockSpec(shape, lambda i: (0, 0),
                            pipeline_mode=pl.Buffered(1))

    out = pl.pallas_call(
        functools.partial(legality_kernel, apply_sigmoid=apply_sigmoid),
        out_shape=jax.ShapeDtypeStruct((B_p, nap), out_dtype),
        grid_spec=pltpu.PrefetchScalarGridSpec(
            num_scalar_prefetch=0,
            grid=grid,
            in_specs=[
                # Batch tile of features (f32; cast to bf16 in-kernel).
                pl.BlockSpec((tile_b, in_dim), lambda i: (i, 0)),
                _wspec((in_dim, h1p)),
                _wspec((1, h1p)),
                _wspec((h1p, h2p)),
                _wspec((1, h2p)),
                _wspec((h2p, nap)),
                _wspec((1, nap)),
            ],
            out_specs=pl.BlockSpec((tile_b, nap), lambda i: (i, 0)),
        ),
        compiler_params=pltpu.CompilerParams(
            # Batch grid is embarrassingly parallel -> megacore sharding.
            dimension_semantics=("parallel",)),
    )(feat, w1, b1, w2, b2, w3, b3)

    if B_p != B or nap != n_actions:
        out = out[:B, :n_actions]
    return out


def init_params(key, in_dim, n_actions, widths=(256, 256)):
    """Xavier-uniform weights (matching nn.init.xavier_uniform_), zero biases.

    Weights are stored [in_features, out_features] so the kernel computes
    y = x @ W + b directly on the MXU.
    """
    params = {}
    dims = [in_dim] + list(widths) + [n_actions]
    keys = jax.random.split(key, len(dims) - 1)
    for idx, (fan_in, fan_out) in enumerate(zip(dims[:-1], dims[1:]), start=1):
        limit = jnp.sqrt(6.0 / (fan_in + fan_out))
        w = jax.random.uniform(keys[idx - 1], (fan_in, fan_out),
                               minval=-limit, maxval=limit,
                               dtype=jnp.float32)
        params[f"w{idx}"] = w
        params[f"b{idx}"] = jnp.zeros((1, fan_out), dtype=jnp.float32)
    return params


if __name__ == "__main__":
    key = jax.random.PRNGKey(0)
    k_feat, k_params = jax.random.split(key)

    B, in_dim, n_actions = 16, 64, 128
    widths = (256, 256)

    feat = jax.random.normal(k_feat, (B, in_dim), dtype=jnp.float32)
    params = init_params(k_params, in_dim, n_actions, widths)

    # One-time weight prep (hoisted out of the forward path).
    prepared = prepare_params(params)

    logits = legality_net(feat, prepared)
    logits = jax.block_until_ready(logits)

    # Pure-JAX reference with matching bf16 matmul / f32 accumulation.
    def ref(x, p):
        bf = jnp.bfloat16
        h = jnp.dot(x.astype(bf), p["w1"].astype(bf),
                    preferred_element_type=jnp.float32) + p["b1"]
        h = jax.nn.silu(h)
        h = jnp.dot(h.astype(bf), p["w2"].astype(bf),
                    preferred_element_type=jnp.float32) + p["b2"]
        h = jax.nn.silu(h)
        return jnp.dot(h.astype(bf), p["w3"].astype(bf),
                       preferred_element_type=jnp.float32) + p["b3"]

    expected = ref(feat, params)
    assert logits.shape == (B, n_actions), logits.shape
    assert jnp.allclose(logits, expected, atol=1e-2, rtol=1e-2), (
        float(jnp.max(jnp.abs(logits - expected))))

    print("KERNEL_OK")
</pallas_src>

<mosaic_0001>
module attributes {stable_mosaic.version = 11 : i64} {
  func.func @legality_kernel(%arg0: i32, %arg1: memref<16x64xf32, #tpu.memory_space<vmem>>, %arg2: memref<64x256xbf16, #tpu.memory_space<vmem>>, %arg3: memref<1x256xf32, #tpu.memory_space<vmem>>, %arg4: memref<256x256xbf16, #tpu.memory_space<vmem>>, %arg5: memref<1x256xf32, #tpu.memory_space<vmem>>, %arg6: memref<256x128xbf16, #tpu.memory_space<vmem>>, %arg7: memref<1x128xf32, #tpu.memory_space<vmem>>, %arg8: memref<16x128xf32, #tpu.memory_space<vmem>>) attributes {dimension_semantics = [#tpu.dimension_semantics<parallel>], iteration_bounds = array<i64: 1>, scalar_prefetch = 0 : i64, scratch_operands = 0 : i64, tpu.core_type = #tpu.core_type<tc>, window_params = [{transform_indices = @transform_0, window_bounds = array<i64: 16, 64>}, {pipeline_mode = #tpu.pipeline_mode<synchronous>, transform_indices = @transform_1, window_bounds = array<i64: 64, 256>}, {pipeline_mode = #tpu.pipeline_mode<synchronous>, transform_indices = @transform_2, window_bounds = array<i64: 1, 256>}, {pipeline_mode = #tpu.pipeline_mode<synchronous>, transform_indices = @transform_3, window_bounds = array<i64: 256, 256>}, {pipeline_mode = #tpu.pipeline_mode<synchronous>, transform_indices = @transform_4, window_bounds = array<i64: 1, 256>}, {pipeline_mode = #tpu.pipeline_mode<synchronous>, transform_indices = @transform_5, window_bounds = array<i64: 256, 128>}, {pipeline_mode = #tpu.pipeline_mode<synchronous>, transform_indices = @transform_6, window_bounds = array<i64: 1, 128>}, {transform_indices = @transform_7, window_bounds = array<i64: 16, 128>}]} {
    %c0 = arith.constant 0 : index
    %c0_0 = arith.constant 0 : index
    %0 = vector.load %arg1[%c0, %c0_0] : memref<16x64xf32, #tpu.memory_space<vmem>>, vector<16x64xf32>
    %1 = arith.truncf %0 : vector<16x64xf32> to vector<16x64xbf16>
    %c0_1 = arith.constant 0 : index
    %c0_2 = arith.constant 0 : index
    %2 = vector.load %arg2[%c0_1, %c0_2] : memref<64x256xbf16, #tpu.memory_space<vmem>>, vector<64x256xbf16>
    %cst = arith.constant dense<0.000000e+00> : vector<16x256xf32>
    %3 = tpu.matmul %1, %2, %cst {dimension_numbers = #tpu.dot_dimension_numbers<[1], [0], [0], [1], [0, 0, 1, 1], [], []>} : vector<16x64xbf16>, vector<64x256xbf16>, vector<16x256xf32> -> vector<16x256xf32>
    %c0_3 = arith.constant 0 : index
    %c0_4 = arith.constant 0 : index
    %4 = vector.load %arg3[%c0_3, %c0_4] : memref<1x256xf32, #tpu.memory_space<vmem>>, vector<1x256xf32>
    %5 = vector.broadcast %4 : vector<1x256xf32> to vector<16x256xf32>
    %6 = arith.addf %3, %5 : vector<16x256xf32>
    %cst_5 = arith.constant 5.000000e-01 : f32
    %7 = vector.broadcast %cst_5 : f32 to vector<16x256xf32>
    %8 = arith.mulf %7, %6 : vector<16x256xf32>
    %9 = math.tanh %8 : vector<16x256xf32>
    %cst_6 = arith.constant 5.000000e-01 : f32
    %10 = vector.broadcast %cst_6 : f32 to vector<16x256xf32>
    %11 = arith.mulf %10, %9 : vector<16x256xf32>
    %cst_7 = arith.constant 5.000000e-01 : f32
    %12 = vector.broadcast %cst_7 : f32 to vector<16x256xf32>
    %13 = arith.addf %11, %12 : vector<16x256xf32>
    %14 = arith.mulf %6, %13 : vector<16x256xf32>
    %15 = arith.truncf %14 : vector<16x256xf32> to vector<16x256xbf16>
    %c0_8 = arith.constant 0 : index
    %c0_9 = arith.constant 0 : index
    %16 = vector.load %arg4[%c0_8, %c0_9] : memref<256x256xbf16, #tpu.memory_space<vmem>>, vector<256x256xbf16>
    %cst_10 = arith.constant dense<0.000000e+00> : vector<16x256xf32>
    %17 = tpu.matmul %15, %16, %cst_10 {dimension_numbers = #tpu.dot_dimension_numbers<[1], [0], [0], [1], [0, 0, 1, 1], [], []>} : vector<16x256xbf16>, vector<256x256xbf16>, vector<16x256xf32> -> vector<16x256xf32>
    %c0_11 = arith.constant 0 : index
    %c0_12 = arith.constant 0 : index
    %18 = vector.load %arg5[%c0_11, %c0_12] : memref<1x256xf32, #tpu.memory_space<vmem>>, vector<1x256xf32>
    %19 = vector.broadcast %18 : vector<1x256xf32> to vector<16x256xf32>
    %20 = arith.addf %17, %19 : vector<16x256xf32>
    %cst_13 = arith.constant 5.000000e-01 : f32
    %21 = vector.broadcast %cst_13 : f32 to vector<16x256xf32>
    %22 = arith.mulf %21, %20 : vector<16x256xf32>
    %23 = math.tanh %22 : vector<16x256xf32>
    %cst_14 = arith.constant 5.000000e-01 : f32
    %24 = vector.broadcast %cst_14 : f32 to vector<16x256xf32>
    %25 = arith.mulf %24, %23 : vector<16x256xf32>
    %cst_15 = arith.constant 5.000000e-01 : f32
    %26 = vector.broadcast %cst_15 : f32 to vector<16x256xf32>
    %27 = arith.addf %25, %26 : vector<16x256xf32>
    %28 = arith.mulf %20, %27 : vector<16x256xf32>
    %29 = arith.truncf %28 : vector<16x256xf32> to vector<16x256xbf16>
    %c0_16 = arith.constant 0 : index
    %c0_17 = arith.constant 0 : index
    %30 = vector.load %arg6[%c0_16, %c0_17] : memref<256x128xbf16, #tpu.memory_space<vmem>>, vector<256x128xbf16>
    %cst_18 = arith.constant dense<0.000000e+00> : vector<16x128xf32>
    %31 = tpu.matmul %29, %30, %cst_18 {dimension_numbers = #tpu.dot_dimension_numbers<[1], [0], [0], [1], [0, 0, 1, 1], [], []>} : vector<16x256xbf16>, vector<256x128xbf16>, vector<16x128xf32> -> vector<16x128xf32>
    %c0_19 = arith.constant 0 : index
    %c0_20 = arith.constant 0 : index
    %32 = vector.load %arg7[%c0_19, %c0_20] : memref<1x128xf32, #tpu.memory_space<vmem>>, vector<1x128xf32>
    %33 = vector.broadcast %32 : vector<1x128xf32> to vector<16x128xf32>
    %34 = arith.addf %31, %33 : vector<16x128xf32>
    %c0_21 = arith.constant 0 : index
    %c0_22 = arith.constant 0 : index
    %35 = vector.load %arg8[%c0_21, %c0_22] : memref<16x128xf32, #tpu.memory_space<vmem>>, vector<16x128xf32>
    tpu.vector_store %arg8[%c0_21, %c0_22], %34 {strides = array<i32>} : memref<16x128xf32, #tpu.memory_space<vmem>>, vector<16x128xf32>,
    return
  }
  func.func @transform_0(%arg0: i32) -> (i32, i32) {
    %c0_i32 = arith.constant 0 : i32
    %c0_i32_0 = arith.constant 0 : i32
    return %arg0, %c0_i32 : i32, i32
  }
  func.func @transform_1(%arg0: i32) -> (i32, i32) {
    %c0_i32 = arith.constant 0 : i32
    %c0_i32_0 = arith.constant 0 : i32
    %c0_i32_1 = arith.constant 0 : i32
    return %c0_i32, %c0_i32_0 : i32, i32
  }
  func.func @transform_2(%arg0: i32) -> (i32, i32) {
    %c0_i32 = arith.constant 0 : i32
    %c0_i32_0 = arith.constant 0 : i32
    %c0_i32_1 = arith.constant 0 : i32
    return %c0_i32, %c0_i32_0 : i32, i32
  }
  func.func @transform_3(%arg0: i32) -> (i32, i32) {
    %c0_i32 = arith.constant 0 : i32
    %c0_i32_0 = arith.constant 0 : i32
    %c0_i32_1 = arith.constant 0 : i32
    return %c0_i32, %c0_i32_0 : i32, i32
  }
  func.func @transform_4(%arg0: i32) -> (i32, i32) {
    %c0_i32 = arith.constant 0 : i32
    %c0_i32_0 = arith.constant 0 : i32
    %c0_i32_1 = arith.constant 0 : i32
    return %c0_i32, %c0_i32_0 : i32, i32
  }
  func.func @transform_5(%arg0: i32) -> (i32, i32) {
    %c0_i32 = arith.constant 0 : i32
    %c0_i32_0 = arith.constant 0 : i32
    %c0_i32_1 = arith.constant 0 : i32
    return %c0_i32, %c0_i32_0 : i32, i32
  }
  func.func @transform_6(%arg0: i32) -> (i32, i32) {
    %c0_i32 = arith.constant 0 : i32
    %c0_i32_0 = arith.constant 0 : i32
    %c0_i32_1 = arith.constant 0 : i32
    return %c0_i32, %c0_i32_0 : i32, i32
  }
  func.func @transform_7(%arg0: i32) -> (i32, i32) {
    %c0_i32 = arith.constant 0 : i32
    %c0_i32_0 = arith.constant 0 : i32
    return %arg0, %c0_i32 : i32, i32
  }
}

</mosaic_0001>

<llo_original>
// kernel: tpu_custom_call.1
$region0: #{tpu_custom_call.1}
  #allocation0 [shape = 'u32[]', space=smem, size = 0x4, offset = 0x4, fixed_abs, tag = 'smem constant byte address 0x4 - core index']
  #allocation1 [shape = 'u32[72,128]{1,0:T(1,128)}', space=vmem, size = 0x9000, scoped, tag = 'internal scratch']
  %s0 = inlined_call_operand.hbm [shape: f32[16,64], index: 0, kind: input, shape index: {}]
  %s1 = inlined_call_operand.hbm [shape: bf16[64,256], index: 1, kind: input, shape index: {}]
  %s2 = inlined_call_operand.hbm [shape: f32[1,256], index: 2, kind: input, shape index: {}]
  %s3 = inlined_call_operand.hbm [shape: bf16[256,256], index: 3, kind: input, shape index: {}]
  %s4 = inlined_call_operand.vmem [shape: f32[1,256], index: 4, kind: input, shape index: {}]
  %s5 = inlined_call_operand.hbm [shape: bf16[256,128], index: 5, kind: input, shape index: {}]
  %s6 = inlined_call_operand.vmem [shape: f32[1,128], index: 6, kind: input, shape index: {}]
  %s7 = inlined_call_operand.hbm [shape: f32[16,128], index: 7, kind: output, shape index: {}]
  %s8 = sld [smem:[#allocation0]]
  $region58: #{tpu_custom_call.1} parent=0
    _
  %s10 = ssub.s32 1, %s8
  %s11 = scalar_select 0, %s10, %s8
  $region1: #{tpu_custom_call.1} parent=0
    #allocation2 [shape = 'u8[8192]{0}', space=vmem, size = 0x2000, scoped, tag = 'input window, operand 0, single buffered']
    #allocation3 [shape = 's32[1]{0}', space=sflag, size = 0x4, scoped, tag = 'scoped memory for tpu_custom_call.1']
    #allocation4 [shape = 's32[1]{0}', space=sflag, size = 0x4, scoped, tag = 'scoped memory for tpu_custom_call.1']
    #allocation5 [shape = 'u8[32768]{0}', space=vmem, size = 0x8000, scoped, tag = 'input window, operand 1, single buffered']
    #allocation6 [shape = 's32[1]{0}', space=sflag, size = 0x4, scoped, tag = 'scoped memory for tpu_custom_call.1']
    #allocation7 [shape = 'u8[1024]{0}', space=vmem, size = 0x400, scoped, tag = 'input window, operand 2, single buffered']
    #allocation8 [shape = 'u8[131072]{0}', space=vmem, size = 0x20000, scoped, tag = 'input window, operand 3, single buffered']
    #allocation9 [shape = 's32[1]{0}', space=sflag, size = 0x4, scoped, tag = 'scoped memory for tpu_custom_call.1']
    #allocation10 [shape = 'u8[65536]{0}', space=vmem, size = 0x10000, scoped, tag = 'input window, operand 5, single buffered']
    #allocation11 [shape = 'u8[8192]{0}', space=vmem, size = 0x2000, scoped, tag = 'output window, operand 0, single buffered']
    %12 = vsyncpa [#allocation3], 0
    %13 = vsyncpa [#allocation6], 0
    %14 = vsyncpa [#allocation9], 0
    %15 = vsyncpa [#allocation4], 0
    // Predicated region
    $region2: #{tpu_custom_call.1} parent=1 // pred_check
      _
    $region3: #{tpu_custom_call.1} parent=1 // pred_check_branch
      %17 = sbr.rel (0) target = $region5
    $region4: #{tpu_custom_call.1} parent=1 // pred_region
      %19 = vsyncadd [#allocation3], 0
      %s20 = sshll.u32 %s0, 4
      %s21 = int_to_ptr.hbm [resolvable:$true] %s20
      %s22 = sshll.u32 [#allocation2], 4
      %s23 = int_to_ptr.vmem [resolvable:$true] %s22
      %28 = dma.hbm_to_vmem [thread:$0]  %s21, 256, %s23, [#allocation3], 128, 128, 8
    $region5: #{tpu_custom_call.1} parent=1 // pred_fallthru
      _
    // Predicated region
    $region6: #{tpu_custom_call.1} parent=1 // pred_check
      _
    $region7: #{tpu_custom_call.1} parent=1 // pred_check_branch
      %30 = sbr.rel (0) target = $region9
    $region8: #{tpu_custom_call.1} parent=1 // pred_region
      %32 = vsyncadd [#allocation6], 0
      %s33 = sshll.u32 %s1, 4
      %s34 = int_to_ptr.hbm [resolvable:$true] %s33
      %s35 = sshll.u32 [#allocation5], 4
      %s36 = int_to_ptr.vmem [resolvable:$true] %s35
      %41 = dma.hbm_to_vmem [thread:$0]  %s34, 1024, %s36, [#allocation6], 128, 128, 8
    $region9: #{tpu_custom_call.1} parent=1 // pred_fallthru
      _
    // Predicated region
    $region10: #{tpu_custom_call.1} parent=1 // pred_check
      _
    $region11: #{tpu_custom_call.1} parent=1 // pred_check_branch
      %43 = sbr.rel (0) target = $region13
    $region12: #{tpu_custom_call.1} parent=1 // pred_region
      %45 = vsyncadd [#allocation6], 0
      %s47 = sshll.u32 %s2, 4
      %s48 = int_to_ptr.hbm [resolvable:$true] %s47
      %s49 = sshll.u32 [#allocation7], 4
      %s50 = int_to_ptr.vmem [resolvable:$true] %s49
      %52 = dma.hbm_to_vmem [thread:$0]  %s48, 32, %s50, [#allocation6]
    $region13: #{tpu_custom_call.1} parent=1 // pred_fallthru
      _
    // Predicated region
    $region14: #{tpu_custom_call.1} parent=1 // pred_check
      _
    $region15: #{tpu_custom_call.1} parent=1 // pred_check_branch
      %54 = sbr.rel (0) target = $region17
    $region16: #{tpu_custom_call.1} parent=1 // pred_region
      %56 = vsyncadd [#allocation9], 0
      %s57 = sshll.u32 %s3, 4
      %s58 = int_to_ptr.hbm [resolvable:$true] %s57
      %s59 = sshll.u32 [#allocation8], 4
      %s60 = int_to_ptr.vmem [resolvable:$true] %s59
      %65 = dma.hbm_to_vmem [thread:$0]  %s58, 4096, %s60, [#allocation9], 128, 128, 8
    $region17: #{tpu_custom_call.1} parent=1 // pred_fallthru
      _
    // Predicated region
    $region18: #{tpu_custom_call.1} parent=1 // pred_check
      _
    $region19: #{tpu_custom_call.1} parent=1 // pred_check_branch
      %67 = sbr.rel (0) target = $region21
    $region20: #{tpu_custom_call.1} parent=1 // pred_region
      _
    $region21: #{tpu_custom_call.1} parent=1 // pred_fallthru
      _
    // Predicated region
    $region22: #{tpu_custom_call.1} parent=1 // pred_check
      _
    $region23: #{tpu_custom_call.1} parent=1 // pred_check_branch
      %69 = sbr.rel (0) target = $region25
    $region24: #{tpu_custom_call.1} parent=1 // pred_region
      %71 = vsyncadd [#allocation9], 0
      %s72 = sshll.u32 %s5, 4
      %s73 = int_to_ptr.hbm [resolvable:$true] %s72
      %s74 = sshll.u32 [#allocation10], 4
      %s75 = int_to_ptr.vmem [resolvable:$true] %s74
      %80 = dma.hbm_to_vmem [thread:$0]  %s73, 2048, %s75, [#allocation9], 64, 64, 4
    $region25: #{tpu_custom_call.1} parent=1 // pred_fallthru
      _
    // Predicated region
    $region26: #{tpu_custom_call.1} parent=1 // pred_check
      _
    $region27: #{tpu_custom_call.1} parent=1 // pred_check_branch
      %82 = sbr.rel (0) target = $region29
    $region28: #{tpu_custom_call.1} parent=1 // pred_region
      _
    $region29: #{tpu_custom_call.1} parent=1 // pred_fallthru
      _
    // Predicated region
    $region30: #{tpu_custom_call.1} parent=1 // pred_check
      _
    $region31: #{tpu_custom_call.1} parent=1 // pred_check_branch
      %84 = sbr.rel (0) target = $region33
    $region32: #{tpu_custom_call.1} parent=1 // pred_region
      %86 = dma.done [#allocation3], 256
    $region33: #{tpu_custom_call.1} parent=1 // pred_fallthru
      _
    // Predicated region
    $region34: #{tpu_custom_call.1} parent=1 // pred_check
      _
    $region35: #{tpu_custom_call.1} parent=1 // pred_check_branch
      %88 = sbr.rel (0) target = $region37
    $region36: #{tpu_custom_call.1} parent=1 // pred_region
      %90 = dma.done [#allocation6], 1024
    $region37: #{tpu_custom_call.1} parent=1 // pred_fallthru
      _
    // Predicated region
    $region38: #{tpu_custom_call.1} parent=1 // pred_check
      _
    $region39: #{tpu_custom_call.1} parent=1 // pred_check_branch
      %92 = sbr.rel (0) target = $region41
    $region40: #{tpu_custom_call.1} parent=1 // pred_region
      %94 = dma.done [#allocation6], 32
    $region41: #{tpu_custom_call.1} parent=1 // pred_fallthru
      _
    // Predicated region
    $region42: #{tpu_custom_call.1} parent=1 // pred_check
      _
    $region43: #{tpu_custom_call.1} parent=1 // pred_check_branch
      %96 = sbr.rel (0) target = $region45
    $region44: #{tpu_custom_call.1} parent=1 // pred_region
      %98 = dma.done [#allocation9], 4096
    $region45: #{tpu_custom_call.1} parent=1 // pred_fallthru
      _
    // Predicated region
    $region46: #{tpu_custom_call.1} parent=1 // pred_check
      _
    $region47: #{tpu_custom_call.1} parent=1 // pred_check_branch
      %100 = sbr.rel (0) target = $region49
    $region48: #{tpu_custom_call.1} parent=1 // pred_region
      %102 = dma.done [#allocation9], 2048
    $region49: #{tpu_custom_call.1} parent=1 // pred_fallthru
      _
    %v104 = vld [vmem:[#allocation2] sm:$0xff]
    %v105 = vld [vmem:[#allocation2 + $0x8] sm:$0xff]
    %v106 = vpack.c.bf16 %v105, %v104
    %v107 = vld [vmem:[#allocation5] sm:$0xff]
    %v108 = vld [vmem:[#allocation5 + $0x8] sm:$0xff]
    %v109 = vld [vmem:[#allocation5 + $0x10] sm:$0xff]
    %v110 = vld [vmem:[#allocation5 + $0x18] sm:$0xff]
    %v111 = vld [vmem:[#allocation5 + $0x20] sm:$0xff]
    %v112 = vld [vmem:[#allocation5 + $0x28] sm:$0xff]
    %v113 = vld [vmem:[#allocation5 + $0x30] sm:$0xff]
    %v114 = vld [vmem:[#allocation5 + $0x38] sm:$0xff]
    %v115 = vld [vmem:[#allocation7] sm:$0x3]
    %v117 = vperm.slane %v115, 0
    %v118 = vperm.slane %v115, 1
    %v129 = vunpack.c.l.b16 %v107
    %v130 = vunpack.c.h.b16 %v107
    %v131 = vunpack.c.l.b16 %v108
    %v132 = vunpack.c.h.b16 %v108
    %v133 = vunpack.c.l.b16 %v109
    %v134 = vunpack.c.h.b16 %v109
    %v135 = vunpack.c.l.b16 %v110
    %v136 = vunpack.c.h.b16 %v110
    %v137 = vunpack.c.l.b16 %v111
    %v138 = vunpack.c.h.b16 %v111
    %v139 = vunpack.c.l.b16 %v112
    %v140 = vunpack.c.h.b16 %v112
    %v141 = vunpack.c.l.b16 %v113
    %v142 = vunpack.c.h.b16 %v113
    %v143 = vunpack.c.l.b16 %v114
    %v144 = vunpack.c.h.b16 %v114
    %v145 = vpack.c.b16 %v131, %v129
    %v146 = vpack.c.b16 %v132, %v130
    %v147 = vpack.c.b16 %v135, %v133
    %v148 = vpack.c.b16 %v136, %v134
    %v149 = vpack.c.b16 %v139, %v137
    %v150 = vpack.c.b16 %v140, %v138
    %v151 = vpack.c.b16 %v143, %v141
    %v152 = vpack.c.b16 %v144, %v142
    %vm161 = vcmask 523264
    %v163 = vsel %vm161, %v106, 0
    %165 = vmatpush.bf16.msra.mxu0 0
    %166 = vmatpush.bf16.msra.mxu0 0
    %167 = vmatpush.bf16.msra.mxu0 0
    %168 = vmatpush.bf16.msra.mxu0 0
    %169 = vmatpush.bf16.msra.mxu0 %v151
    %170 = vmatpush.bf16.msra.mxu0 %v149
    %171 = vmatpush.bf16.msra.mxu0 %v147
    %172 = vmatpush.bf16.msra.mxu0 %v145
    %173 = vmatmul.bf16.gmra.mxu0 %v163
    %v174 = vpop.f32.mrf.mxu0
    %v175 = vadd.f32 %v117, %v174
    %v176 = vpop.f32.mrf.mxu0
    %v177 = vadd.f32 %v117, %v176
    %178 = vdwg.mxu0
    %179 = vmatpush.bf16.msra.mxu0 0
    %180 = vmatpush.bf16.msra.mxu0 0
    %181 = vmatpush.bf16.msra.mxu0 0
    %182 = vmatpush.bf16.msra.mxu0 0
    %183 = vmatpush.bf16.msra.mxu0 %v152
    %184 = vmatpush.bf16.msra.mxu0 %v150
    %185 = vmatpush.bf16.msra.mxu0 %v148
    %186 = vmatpush.bf16.msra.mxu0 %v146
    %187 = vmatmul.bf16.gmra.mxu0 %v163
    %v188 = vpop.f32.mrf.mxu0
    %v189 = vadd.f32 %v118, %v188
    %v190 = vpop.f32.mrf.mxu0
    %v191 = vadd.f32 %v118, %v190
    %192 = vdwg.mxu0
    %v193 = vmul.f32 %v175, 0.5
    %v194 = vmul.f32 %v189, 0.5
    %v195 = vmul.f32 %v177, 0.5
    %v196 = vmul.f32 %v191, 0.5
    %v197 = vtanh.pop %v193
    %v198 = vtanh.pop %v194
    %v199 = vtanh.pop %v195
    %v200 = vtanh.pop %v196
    %v201 = vmul.f32 %v197, 0.5
    %v202 = vmul.f32 %v198, 0.5
    %v203 = vmul.f32 %v199, 0.5
    %v204 = vmul.f32 %v200, 0.5
    %v205 = vadd.f32 %v201, 0.5
    %v206 = vadd.f32 %v202, 0.5
    %v207 = vadd.f32 %v203, 0.5
    %v208 = vadd.f32 %v204, 0.5
    %v209 = vmul.f32 %v175, %v205
    %v210 = vmul.f32 %v189, %v206
    %v211 = vmul.f32 %v177, %v207
    %v212 = vmul.f32 %v191, %v208
    %v213 = vpack.c.bf16 %v211, %v209
    %v214 = vpack.c.bf16 %v212, %v210
    %v215 = vld [vmem:[#allocation8] sm:$0xff]
    %v216 = vld [vmem:[#allocation8 + $0x8] sm:$0xff]
    %v217 = vld [vmem:[#allocation8 + $0x10] sm:$0xff]
    %v218 = vld [vmem:[#allocation8 + $0x18] sm:$0xff]
    %v219 = vld [vmem:[#allocation8 + $0x20] sm:$0xff]
    %v220 = vld [vmem:[#allocation8 + $0x28] sm:$0xff]
    %v221 = vld [vmem:[#allocation8 + $0x30] sm:$0xff]
    %v222 = vld [vmem:[#allocation8 + $0x38] sm:$0xff]
    %v223 = vld [vmem:[#allocation8 + $0x40] sm:$0xff]
    %v224 = vld [vmem:[#allocation8 + $0x48] sm:$0xff]
    %v225 = vld [vmem:[#allocation8 + $0x50] sm:$0xff]
    %v226 = vld [vmem:[#allocation8 + $0x58] sm:$0xff]
    %v227 = vld [vmem:[#allocation8 + $0x60] sm:$0xff]
    %v228 = vld [vmem:[#allocation8 + $0x68] sm:$0xff]
    %v229 = vld [vmem:[#allocation8 + $0x70] sm:$0xff]
    %v230 = vld [vmem:[#allocation8 + $0x78] sm:$0xff]
    %v231 = vld [vmem:[#allocation8 + $0x80] sm:$0xff]
    %v232 = vld [vmem:[#allocation8 + $0x88] sm:$0xff]
    %v233 = vld [vmem:[#allocation8 + $0x90] sm:$0xff]
    %v234 = vld [vmem:[#allocation8 + $0x98] sm:$0xff]
    %v235 = vld [vmem:[#allocation8 + $0xa0] sm:$0xff]
    %v236 = vld [vmem:[#allocation8 + $0xa8] sm:$0xff]
    %v237 = vld [vmem:[#allocation8 + $0xb0] sm:$0xff]
    %v238 = vld [vmem:[#allocation8 + $0xb8] sm:$0xff]
    %v239 = vld [vmem:[#allocation8 + $0xc0] sm:$0xff]
    %v240 = vld [vmem:[#allocation8 + $0xc8] sm:$0xff]
    %v241 = vld [vmem:[#allocation8 + $0xd0] sm:$0xff]
    %v242 = vld [vmem:[#allocation8 + $0xd8] sm:$0xff]
    %v243 = vld [vmem:[#allocation8 + $0xe0] sm:$0xff]
    %v244 = vld [vmem:[#allocation8 + $0xe8] sm:$0xff]
    %v245 = vld [vmem:[#allocation8 + $0xf0] sm:$0xff]
    %v246 = vld [vmem:[#allocation8 + $0xf8] sm:$0xff]
    %v247 = vld [vmem:[%s4] sm:$0x3]
    %v249 = vperm.slane %v247, 0
    %v250 = vperm.slane %v247, 1
    %v285 = vunpack.c.l.b16 %v215
    %v286 = vunpack.c.h.b16 %v215
    %v287 = vunpack.c.l.b16 %v216
    %v288 = vunpack.c.h.b16 %v216
    %v289 = vunpack.c.l.b16 %v217
    %v290 = vunpack.c.h.b16 %v217
    %v291 = vunpack.c.l.b16 %v218
    %v292 = vunpack.c.h.b16 %v218
    %v293 = vunpack.c.l.b16 %v219
    %v294 = vunpack.c.h.b16 %v219
    %v295 = vunpack.c.l.b16 %v220
    %v296 = vunpack.c.h.b16 %v220
    %v297 = vunpack.c.l.b16 %v221
    %v298 = vunpack.c.h.b16 %v221
    %v299 = vunpack.c.l.b16 %v222
    %v300 = vunpack.c.h.b16 %v222
    %v301 = vunpack.c.l.b16 %v223
    %v302 = vunpack.c.h.b16 %v223
    %v303 = vunpack.c.l.b16 %v224
    %v304 = vunpack.c.h.b16 %v224
    %v305 = vunpack.c.l.b16 %v225
    %v306 = vunpack.c.h.b16 %v225
    %v307 = vunpack.c.l.b16 %v226
    %v308 = vunpack.c.h.b16 %v226
    %v309 = vunpack.c.l.b16 %v227
    %v310 = vunpack.c.h.b16 %v227
    %v311 = vunpack.c.l.b16 %v228
    %v312 = vunpack.c.h.b16 %v228
    %v313 = vunpack.c.l.b16 %v229
    %v314 = vunpack.c.h.b16 %v229
    %v315 = vunpack.c.l.b16 %v230
    %v316 = vunpack.c.h.b16 %v230
    %v317 = vunpack.c.l.b16 %v231
    %v318 = vunpack.c.h.b16 %v231
    %v319 = vunpack.c.l.b16 %v232
    %v320 = vunpack.c.h.b16 %v232
    %v321 = vunpack.c.l.b16 %v233
    %v322 = vunpack.c.h.b16 %v233
    %v323 = vunpack.c.l.b16 %v234
    %v324 = vunpack.c.h.b16 %v234
    %v325 = vunpack.c.l.b16 %v235
    %v326 = vunpack.c.h.b16 %v235
    %v327 = vunpack.c.l.b16 %v236
    %v328 = vunpack.c.h.b16 %v236
    %v329 = vunpack.c.l.b16 %v237
    %v330 = vunpack.c.h.b16 %v237
    %v331 = vunpack.c.l.b16 %v238
    %v332 = vunpack.c.h.b16 %v238
    %v333 = vunpack.c.l.b16 %v239
    %v334 = vunpack.c.h.b16 %v239
    %v335 = vunpack.c.l.b16 %v240
    %v336 = vunpack.c.h.b16 %v240
    %v337 = vunpack.c.l.b16 %v241
    %v338 = vunpack.c.h.b16 %v241
    %v339 = vunpack.c.l.b16 %v242
    %v340 = vunpack.c.h.b16 %v242
    %v341 = vunpack.c.l.b16 %v243
    %v342 = vunpack.c.h.b16 %v243
    %v343 = vunpack.c.l.b16 %v244
    %v344 = vunpack.c.h.b16 %v244
    %v345 = vunpack.c.l.b16 %v245
    %v346 = vunpack.c.h.b16 %v245
    %v347 = vunpack.c.l.b16 %v246
    %v348 = vunpack.c.h.b16 %v246
    %v349 = vpack.c.b16 %v287, %v285
    %v350 = vpack.c.b16 %v288, %v286
    %v351 = vpack.c.b16 %v291, %v289
    %v352 = vpack.c.b16 %v292, %v290
    %v353 = vpack.c.b16 %v295, %v293
    %v354 = vpack.c.b16 %v296, %v294
    %v355 = vpack.c.b16 %v299, %v297
    %v356 = vpack.c.b16 %v300, %v298
    %v357 = vpack.c.b16 %v303, %v301
    %v358 = vpack.c.b16 %v304, %v302
    %v359 = vpack.c.b16 %v307, %v305
    %v360 = vpack.c.b16 %v308, %v306
    %v361 = vpack.c.b16 %v311, %v309
    %v362 = vpack.c.b16 %v312, %v310
    %v363 = vpack.c.b16 %v315, %v313
    %v364 = vpack.c.b16 %v316, %v314
    %v365 = vpack.c.b16 %v319, %v317
    %v366 = vpack.c.b16 %v320, %v318
    %v367 = vpack.c.b16 %v323, %v321
    %v368 = vpack.c.b16 %v324, %v322
    %v369 = vpack.c.b16 %v327, %v325
    %v370 = vpack.c.b16 %v328, %v326
    %v371 = vpack.c.b16 %v331, %v329
    %v372 = vpack.c.b16 %v332, %v330
    %v373 = vpack.c.b16 %v335, %v333
    %v374 = vpack.c.b16 %v336, %v334
    %v375 = vpack.c.b16 %v339, %v337
    %v376 = vpack.c.b16 %v340, %v338
    %v377 = vpack.c.b16 %v343, %v341
    %v378 = vpack.c.b16 %v344, %v342
    %v379 = vpack.c.b16 %v347, %v345
    %v380 = vpack.c.b16 %v348, %v346
    %413 = vmatpush.bf16.msra.mxu0 %v363
    %414 = vmatpush.bf16.msra.mxu0 %v361
    %415 = vmatpush.bf16.msra.mxu0 %v359
    %416 = vmatpush.bf16.msra.mxu0 %v357
    %417 = vmatpush.bf16.msra.mxu0 %v355
    %418 = vmatpush.bf16.msra.mxu0 %v353
    %419 = vmatpush.bf16.msra.mxu0 %v351
    %420 = vmatpush.bf16.msra.mxu0 %v349
    %421 = vmatmul.bf16.gmra.mxu0 %v213
    %v422 = vpop.f32.mrf.mxu0
    %v423 = vadd.f32 %v249, %v422
    %v424 = vpop.f32.mrf.mxu0
    %v425 = vadd.f32 %v249, %v424
    %426 = vdwg.mxu0
    %427 = vmatpush.bf16.msra.mxu0 %v379
    %428 = vmatpush.bf16.msra.mxu0 %v377
    %429 = vmatpush.bf16.msra.mxu0 %v375
    %430 = vmatpush.bf16.msra.mxu0 %v373
    %431 = vmatpush.bf16.msra.mxu0 %v371
    %432 = vmatpush.bf16.msra.mxu0 %v369
    %433 = vmatpush.bf16.msra.mxu0 %v367
    %434 = vmatpush.bf16.msra.mxu0 %v365
    %435 = vmatmul.bf16.gmra.mxu0 %v214
    %v436 = vpop.f32.mrf.mxu0
    %v437 = vadd.f32 %v423, %v436
    %v438 = vpop.f32.mrf.mxu0
    %v439 = vadd.f32 %v425, %v438
    %440 = vdwg.mxu0
    %441 = vmatpush.bf16.msra.mxu0 %v364
    %442 = vmatpush.bf16.msra.mxu0 %v362
    %443 = vmatpush.bf16.msra.mxu0 %v360
    %444 = vmatpush.bf16.msra.mxu0 %v358
    %445 = vmatpush.bf16.msra.mxu0 %v356
    %446 = vmatpush.bf16.msra.mxu0 %v354
    %447 = vmatpush.bf16.msra.mxu0 %v352
    %448 = vmatpush.bf16.msra.mxu0 %v350
    %449 = vmatmul.bf16.gmra.mxu0 %v213
    %v450 = vpop.f32.mrf.mxu0
    %v451 = vadd.f32 %v250, %v450
    %v452 = vpop.f32.mrf.mxu0
    %v453 = vadd.f32 %v250, %v452
    %454 = vdwg.mxu0
    %455 = vmatpush.bf16.msra.mxu0 %v380
    %456 = vmatpush.bf16.msra.mxu0 %v378
    %457 = vmatpush.bf16.msra.mxu0 %v376
    %458 = vmatpush.bf16.msra.mxu0 %v374
    %459 = vmatpush.bf16.msra.mxu0 %v372
    %460 = vmatpush.bf16.msra.mxu0 %v370
    %461 = vmatpush.bf16.msra.mxu0 %v368
    %462 = vmatpush.bf16.msra.mxu0 %v366
    %463 = vmatmul.bf16.gmra.mxu0 %v214
    %v464 = vpop.f32.mrf.mxu0
    %v465 = vadd.f32 %v451, %v464
    %v466 = vpop.f32.mrf.mxu0
    %v467 = vadd.f32 %v453, %v466
    %468 = vdwg.mxu0
    %v469 = vmul.f32 %v437, 0.5
    %v470 = vmul.f32 %v465, 0.5
    %v471 = vmul.f32 %v439, 0.5
    %v472 = vmul.f32 %v467, 0.5
    %v473 = vtanh.pop %v469
    %v474 = vtanh.pop %v470
    %v475 = vtanh.pop %v471
    %v476 = vtanh.pop %v472
    %v477 = vmul.f32 %v473, 0.5
    %v478 = vmul.f32 %v474, 0.5
    %v479 = vmul.f32 %v475, 0.5
    %v480 = vmul.f32 %v476, 0.5
    %v481 = vadd.f32 %v477, 0.5
    %v482 = vadd.f32 %v478, 0.5
    %v483 = vadd.f32 %v479, 0.5
    %v484 = vadd.f32 %v480, 0.5
    %v485 = vmul.f32 %v437, %v481
    %v486 = vmul.f32 %v465, %v482
    %v487 = vmul.f32 %v439, %v483
    %v488 = vmul.f32 %v467, %v484
    %v489 = vpack.c.bf16 %v487, %v485
    %v490 = vpack.c.bf16 %v488, %v486
    %v491 = vld [vmem:[#allocation10] sm:$0xf]
    %v492 = vld [vmem:[#allocation10 + $0x4] sm:$0xf]
    %v493 = vld [vmem:[#allocation10 + $0x8] sm:$0xf]
    %v494 = vld [vmem:[#allocation10 + $0xc] sm:$0xf]
    %v495 = vld [vmem:[#allocation10 + $0x10] sm:$0xf]
    %v496 = vld [vmem:[#allocation10 + $0x14] sm:$0xf]
    %v497 = vld [vmem:[#allocation10 + $0x18] sm:$0xf]
    %v498 = vld [vmem:[#allocation10 + $0x1c] sm:$0xf]
    %v499 = vld [vmem:[#allocation10 + $0x20] sm:$0xf]
    %v500 = vld [vmem:[#allocation10 + $0x24] sm:$0xf]
    %v501 = vld [vmem:[#allocation10 + $0x28] sm:$0xf]
    %v502 = vld [vmem:[#allocation10 + $0x2c] sm:$0xf]
    %v503 = vld [vmem:[#allocation10 + $0x30] sm:$0xf]
    %v504 = vld [vmem:[#allocation10 + $0x34] sm:$0xf]
    %v505 = vld [vmem:[#allocation10 + $0x38] sm:$0xf]
    %v506 = vld [vmem:[#allocation10 + $0x3c] sm:$0xf]
    %v507 = vld [vmem:[#allocation10 + $0x40] sm:$0xf]
    %v508 = vld [vmem:[#allocation10 + $0x44] sm:$0xf]
    %v509 = vld [vmem:[#allocation10 + $0x48] sm:$0xf]
    %v510 = vld [vmem:[#allocation10 + $0x4c] sm:$0xf]
    %v511 = vld [vmem:[#allocation10 + $0x50] sm:$0xf]
    %v512 = vld [vmem:[#allocation10 + $0x54] sm:$0xf]
    %v513 = vld [vmem:[#allocation10 + $0x58] sm:$0xf]
    %v514 = vld [vmem:[#allocation10 + $0x5c] sm:$0xf]
    %v515 = vld [vmem:[#allocation10 + $0x60] sm:$0xf]
    %v516 = vld [vmem:[#allocation10 + $0x64] sm:$0xf]
    %v517 = vld [vmem:[#allocation10 + $0x68] sm:$0xf]
    %v518 = vld [vmem:[#allocation10 + $0x6c] sm:$0xf]
    %v519 = vld [vmem:[#allocation10 + $0x70] sm:$0xf]
    %v520 = vld [vmem:[#allocation10 + $0x74] sm:$0xf]
    %v521 = vld [vmem:[#allocation10 + $0x78] sm:$0xf]
    %v522 = vld [vmem:[#allocation10 + $0x7c] sm:$0xf]
    %v523 = vld [vmem:[%s6] sm:$0x1]
    %v525 = vperm.slane %v523, 0
    %v559 = vunpack.c.l.b16 %v491
    %v560 = vunpack.c.l.b16 %v492
    %v561 = vunpack.c.l.b16 %v493
    %v562 = vunpack.c.l.b16 %v494
    %v563 = vunpack.c.l.b16 %v495
    %v564 = vunpack.c.l.b16 %v496
    %v565 = vunpack.c.l.b16 %v497
    %v566 = vunpack.c.l.b16 %v498
    %v567 = vunpack.c.l.b16 %v499
    %v568 = vunpack.c.l.b16 %v500
    %v569 = vunpack.c.l.b16 %v501
    %v570 = vunpack.c.l.b16 %v502
    %v571 = vunpack.c.l.b16 %v503
    %v572 = vunpack.c.l.b16 %v504
    %v573 = vunpack.c.l.b16 %v505
    %v574 = vunpack.c.l.b16 %v506
    %v575 = vunpack.c.l.b16 %v507
    %v576 = vunpack.c.l.b16 %v508
    %v577 = vunpack.c.l.b16 %v509
    %v578 = vunpack.c.l.b16 %v510
    %v579 = vunpack.c.l.b16 %v511
    %v580 = vunpack.c.l.b16 %v512
    %v581 = vunpack.c.l.b16 %v513
    %v582 = vunpack.c.l.b16 %v514
    %v583 = vunpack.c.l.b16 %v515
    %v584 = vunpack.c.l.b16 %v516
    %v585 = vunpack.c.l.b16 %v517
    %v586 = vunpack.c.l.b16 %v518
    %v587 = vunpack.c.l.b16 %v519
    %v588 = vunpack.c.l.b16 %v520
    %v589 = vunpack.c.l.b16 %v521
    %v590 = vunpack.c.l.b16 %v522
    %v591 = vpack.c.b16 %v560, %v559
    %v592 = vpack.c.b16 %v562, %v561
    %v593 = vpack.c.b16 %v564, %v563
    %v594 = vpack.c.b16 %v566, %v565
    %v595 = vpack.c.b16 %v568, %v567
    %v596 = vpack.c.b16 %v570, %v569
    %v597 = vpack.c.b16 %v572, %v571
    %v598 = vpack.c.b16 %v574, %v573
    %v599 = vpack.c.b16 %v576, %v575
    %v600 = vpack.c.b16 %v578, %v577
    %v601 = vpack.c.b16 %v580, %v579
    %v602 = vpack.c.b16 %v582, %v581
    %v603 = vpack.c.b16 %v584, %v583
    %v604 = vpack.c.b16 %v586, %v585
    %v605 = vpack.c.b16 %v588, %v587
    %v606 = vpack.c.b16 %v590, %v589
    %623 = vmatpush.bf16.msra.mxu0 %v598
    %624 = vmatpush.bf16.msra.mxu0 %v597
    %625 = vmatpush.bf16.msra.mxu0 %v596
    %626 = vmatpush.bf16.msra.mxu0 %v595
    %627 = vmatpush.bf16.msra.mxu0 %v594
    %628 = vmatpush.bf16.msra.mxu0 %v593
    %629 = vmatpush.bf16.msra.mxu0 %v592
    %630 = vmatpush.bf16.msra.mxu0 %v591
    %631 = vmatmul.bf16.gmra.mxu0 %v489
    %v632 = vpop.f32.mrf.mxu0
    %v633 = vadd.f32 %v525, %v632
    %v634 = vpop.f32.mrf.mxu0
    %v635 = vadd.f32 %v525, %v634
    %636 = vdwg.mxu0
    %637 = vmatpush.bf16.msra.mxu0 %v606
    %638 = vmatpush.bf16.msra.mxu0 %v605
    %639 = vmatpush.bf16.msra.mxu0 %v604
    %640 = vmatpush.bf16.msra.mxu0 %v603
    %641 = vmatpush.bf16.msra.mxu0 %v602
    %642 = vmatpush.bf16.msra.mxu0 %v601
    %643 = vmatpush.bf16.msra.mxu0 %v600
    %644 = vmatpush.bf16.msra.mxu0 %v599
    %645 = vmatmul.bf16.gmra.mxu0 %v490
    %v646 = vpop.f32.mrf.mxu0
    %v647 = vadd.f32 %v633, %v646
    %v648 = vpop.f32.mrf.mxu0
    %v649 = vadd.f32 %v635, %v648
    %650 = vdwg.mxu0
    %651 = vst [vmem:[#allocation11] sm:$0xff] %v647
    %652 = vst [vmem:[#allocation11 + $0x8] sm:$0xff] %v649
    // Predicated region
    $region50: #{tpu_custom_call.1} parent=1 // pred_check
      _
    $region51: #{tpu_custom_call.1} parent=1 // pred_check_branch
      %654 = sbr.rel (0) target = $region53
    $region52: #{tpu_custom_call.1} parent=1 // pred_region
      %656 = vsyncadd [#allocation4], 0
      %s657 = sshll.u32 [#allocation11], 4
      %s658 = int_to_ptr.vmem [resolvable:$true] %s657
      %s659 = sshll.u32 %s7, 4
      %s660 = int_to_ptr.hbm [resolvable:$true] %s659
      %665 = dma.vmem_to_hbm [thread:$0]  %s658, 256, %s660, [#allocation4], 128, 128, 8
    $region53: #{tpu_custom_call.1} parent=1 // pred_fallthru
      _
    // Predicated region
    $region54: #{tpu_custom_call.1} parent=1 // pred_check
      _
    $region55: #{tpu_custom_call.1} parent=1 // pred_check_branch
      %667 = sbr.rel (0) target = $region57
    $region56: #{tpu_custom_call.1} parent=1 // pred_region
      %669 = dma.done [#allocation4], 256
    $region57: #{tpu_custom_call.1} parent=1 // pred_fallthru
      _
    %670 = vsyncpa [#allocation3], 1
    %671 = vsyncpa [#allocation6], 1
    %672 = vsyncpa [#allocation9], 1
    %673 = vsyncpa [#allocation4], 1

</llo_original>
